<compile_context>
chip_gen: v6e
topology: v6e:2x2x1
jax: 0.10.0
libtpu: 0.0.40
codegen_flags: <defaults>
</compile_context>

<pallas_src>
from functools import partial

import jax
import jax.numpy as jnp
from jax.experimental import pallas as pl
from jax.experimental.pallas import tpu as pltpu

N_TOPICS = 16
N_SCALARS = 1            # fixed by the module (self.n_scalars = 1)
TIME_TOPIC_DIM = 300     # fixed by the module (self.time_topic_dim = 300)
VOCAB_SIZE = 32


def _cov_mlp_kernel(x_ref, w1_ref, b1_ref, w2_ref, o_ref):
    # x_ref:  (TM, in_features)        w1_ref: (in_features, hidden)
    # b1_ref: (1, hidden)              w2_ref: (hidden, vocab_padded)
    # o_ref:  (TM, vocab_padded)
    h = jnp.dot(x_ref[...], w1_ref[...],
                preferred_element_type=jnp.float32) + b1_ref[...]
    h = jnp.maximum(h, 0.0)                                   # ReLU
    o_ref[...] = jnp.dot(h, w2_ref[...],
                         preferred_element_type=jnp.float32).astype(o_ref.dtype)


@partial(jax.jit, static_argnames=("row_pad", "tm", "vocab_pad"))
def _run_pallas(x, w1, b1_2d, w2p, *, row_pad, tm, vocab_pad):
    B, in_features = x.shape
    hidden = w1.shape[1]
    vocab_p = w2p.shape[1]

    xp = jnp.pad(x, ((0, row_pad), (0, 0))) if row_pad else x
    b_p = B + row_pad
    grid = (b_p // tm,)

    cost = pl.CostEstimate(
        flops=2 * b_p * (in_features * hidden + hidden * vocab_p),
        transcendentals=0,
        bytes_accessed=4 * (b_p * in_features + in_features * hidden + hidden
                            + hidden * vocab_p + b_p * vocab_p),
    )

    out = pl.pallas_call(
        _cov_mlp_kernel,
        out_shape=jax.ShapeDtypeStruct((b_p, vocab_p), jnp.float32),
        grid=grid,
        in_specs=[
            pl.BlockSpec((tm, in_features), lambda i: (i, 0)),      # x: tiled over batch
            pl.BlockSpec((in_features, hidden), lambda i: (0, 0)),  # w1: VMEM-resident
            pl.BlockSpec((1, hidden), lambda i: (0, 0)),            # b1: VMEM-resident
            pl.BlockSpec((hidden, vocab_p), lambda i: (0, 0)),      # w2: VMEM-resident
        ],
        out_specs=pl.BlockSpec((tm, vocab_p), lambda i: (i, 0)),
        compiler_params=pltpu.CompilerParams(
            dimension_semantics=("parallel",)),                     # 2 TCs on v7x
        cost_estimate=cost,
    )(xp, w1, b1_2d, w2p)

    vocab = vocab_p - vocab_pad
    return out[:B, :vocab]


def continuous_covariate_forward_batched(topic_distrib, scalars, w1, b1, w2):
    """Batched forward.

    topic_distrib: (B, n_topics) f32, scalars: (B, n_scalars) f32.
    w1: (n_topics + n_scalars, 300), b1: (300,), w2: (300, vocab)
    (weights stored as (in, out) = transpose of torch nn.Linear.weight).
    Returns (B, vocab).
    """
    x = jnp.concatenate((topic_distrib, scalars), axis=1).astype(jnp.float32)
    B = x.shape[0]
    hidden = w1.shape[1]
    vocab = w2.shape[1]

    # Lane-dense output: zero-pad vocab up to a multiple of 128 (sliced off after).
    vocab_pad = -vocab % 128
    w2p = w2.astype(jnp.float32)
    if vocab_pad:
        w2p = jnp.pad(w2p, ((0, 0), (0, vocab_pad)))

    # Batch tiling: one grid step per TM rows.  Small batches -> single step.
    if B <= 128:
        row_pad = -B % 8
        tm = B + row_pad
    else:
        row_pad = -B % 128
        tm = 128

    b1_2d = b1.reshape(1, hidden).astype(jnp.float32)
    w1f = w1.astype(jnp.float32)

    return _run_pallas(x, w1f, b1_2d, w2p,
                       row_pad=row_pad, tm=tm, vocab_pad=vocab_pad)


def continuous_covariate_forward(topic_distrib, scalars, w1, b1, w2):
    """Single-sample path matching the torch forward (1-D inputs, dim-0 concat)."""
    out = continuous_covariate_forward_batched(
        topic_distrib.reshape(1, -1), scalars.reshape(1, -1), w1, b1, w2)
    return out.reshape(-1)


def _reference_forward_batched(topic_distrib, scalars, w1, b1, w2):
    x = jnp.concatenate((topic_distrib, scalars), axis=1)
    h = jnp.maximum(x @ w1 + b1, 0.0)
    return h @ w2


if __name__ == "__main__":
    key = jax.random.PRNGKey(0)
    k_t, k_s, k_w1, k_b1, k_w2 = jax.random.split(key, 5)

    # Deterministic synthetic parameters (stored (in, out) — torch weight transpose).
    in_units = N_SCALARS + N_TOPICS
    w1 = jax.random.normal(k_w1, (in_units, TIME_TOPIC_DIM), jnp.float32) * 0.05
    b1 = jax.random.normal(k_b1, (TIME_TOPIC_DIM,), jnp.float32) * 0.05
    w2 = jax.random.normal(k_w2, (TIME_TOPIC_DIM, VOCAB_SIZE), jnp.float32) * 0.05

    # Small batch of samples (B multiple of 8 to avoid padding in the demo).
    B = 8
    topic_distrib = jax.nn.softmax(
        jax.random.normal(k_t, (B, N_TOPICS), jnp.float32), axis=-1)
    scalars = jax.random.normal(k_s, (B, N_SCALARS), jnp.float32)

    # Batched kernel vs. reference.
    out_b = continuous_covariate_forward_batched(topic_distrib, scalars, w1, b1, w2)
    out_b = jax.block_until_ready(out_b)
    ref_b = _reference_forward_batched(topic_distrib, scalars, w1, b1, w2)
    assert out_b.shape == (B, VOCAB_SIZE)
    assert jnp.allclose(out_b, ref_b, atol=1e-5, rtol=1e-5), "batched mismatch vs reference"

    # Single-sample path (matches the original torch dim-0 concat semantics).
    out_1 = continuous_covariate_forward(topic_distrib[0], scalars[0], w1, b1, w2)
    out_1 = jax.block_until_ready(out_1)
    assert out_1.shape == (VOCAB_SIZE,)
    assert jnp.allclose(out_1, ref_b[0], atol=1e-5, rtol=1e-5), "single-sample mismatch"

    # Odd batch size exercises the row-padding path.
    B2 = 5
    out_odd = continuous_covariate_forward_batched(
        topic_distrib[:B2], scalars[:B2], w1, b1, w2)
    out_odd = jax.block_until_ready(out_odd)
    assert out_odd.shape == (B2, VOCAB_SIZE)
    assert jnp.allclose(out_odd, ref_b[:B2], atol=1e-5, rtol=1e-5), "padded-batch mismatch"

    print("KERNEL_OK")
</pallas_src>

<mosaic_0001>
module attributes {stable_mosaic.version = 11 : i64} {
  func.func @_cov_mlp_kernel(%arg0: i32, %arg1: memref<8x17xf32, #tpu.memory_space<vmem>>, %arg2: memref<17x300xf32, #tpu.memory_space<vmem>>, %arg3: memref<1x300xf32, #tpu.memory_space<vmem>>, %arg4: memref<300x128xf32, #tpu.memory_space<vmem>>, %arg5: memref<8x128xf32, #tpu.memory_space<vmem>>) attributes {dimension_semantics = [#tpu.dimension_semantics<parallel>], iteration_bounds = array<i64: 1>, scalar_prefetch = 0 : i64, scratch_operands = 0 : i64, tpu.core_type = #tpu.core_type<tc>, window_params = [{transform_indices = @transform_0, window_bounds = array<i64: 8, 17>}, {pipeline_mode = #tpu.pipeline_mode<synchronous>, transform_indices = @transform_1, window_bounds = array<i64: 17, 300>}, {pipeline_mode = #tpu.pipeline_mode<synchronous>, transform_indices = @transform_2, window_bounds = array<i64: 1, 300>}, {pipeline_mode = #tpu.pipeline_mode<synchronous>, transform_indices = @transform_3, window_bounds = array<i64: 300, 128>}, {transform_indices = @transform_4, window_bounds = array<i64: 8, 128>}]} {
    %c0 = arith.constant 0 : index
    %c0_0 = arith.constant 0 : index
    %0 = vector.load %arg1[%c0, %c0_0] : memref<8x17xf32, #tpu.memory_space<vmem>>, vector<8x17xf32>
    %c0_1 = arith.constant 0 : index
    %c0_2 = arith.constant 0 : index
    %1 = vector.load %arg2[%c0_1, %c0_2] : memref<17x300xf32, #tpu.memory_space<vmem>>, vector<17x300xf32>
    %cst = arith.constant dense<0.000000e+00> : vector<8x300xf32>
    %2 = tpu.matmul %0, %1, %cst {dimension_numbers = #tpu.dot_dimension_numbers<[1], [0], [0], [1], [0, 0, 1, 1], [], []>} : vector<8x17xf32>, vector<17x300xf32>, vector<8x300xf32> -> vector<8x300xf32>
    %c0_3 = arith.constant 0 : index
    %c0_4 = arith.constant 0 : index
    %3 = vector.load %arg3[%c0_3, %c0_4] : memref<1x300xf32, #tpu.memory_space<vmem>>, vector<1x300xf32>
    %4 = vector.broadcast %3 : vector<1x300xf32> to vector<8x300xf32>
    %5 = arith.addf %2, %4 : vector<8x300xf32>
    %cst_5 = arith.constant 0.000000e+00 : f32
    %6 = vector.broadcast %cst_5 : f32 to vector<8x300xf32>
    %7 = arith.maximumf %5, %6 : vector<8x300xf32>
    %c0_6 = arith.constant 0 : index
    %c0_7 = arith.constant 0 : index
    %8 = vector.load %arg4[%c0_6, %c0_7] : memref<300x128xf32, #tpu.memory_space<vmem>>, vector<300x128xf32>
    %cst_8 = arith.constant dense<0.000000e+00> : vector<8x128xf32>
    %9 = tpu.matmul %7, %8, %cst_8 {dimension_numbers = #tpu.dot_dimension_numbers<[1], [0], [0], [1], [0, 0, 1, 1], [], []>} : vector<8x300xf32>, vector<300x128xf32>, vector<8x128xf32> -> vector<8x128xf32>
    %c0_9 = arith.constant 0 : index
    %c0_10 = arith.constant 0 : index
    %10 = vector.load %arg5[%c0_9, %c0_10] : memref<8x128xf32, #tpu.memory_space<vmem>>, vector<8x128xf32>
    tpu.vector_store %arg5[%c0_9, %c0_10], %9 {strides = array<i32>} : memref<8x128xf32, #tpu.memory_space<vmem>>, vector<8x128xf32>,
    return
  }
  func.func @transform_0(%arg0: i32) -> (i32, i32) {
    %c0_i32 = arith.constant 0 : i32
    %c0_i32_0 = arith.constant 0 : i32
    return %arg0, %c0_i32 : i32, i32
  }
  func.func @transform_1(%arg0: i32) -> (i32, i32) {
    %c0_i32 = arith.constant 0 : i32
    %c0_i32_0 = arith.constant 0 : i32
    %c0_i32_1 = arith.constant 0 : i32
    return %c0_i32, %c0_i32_0 : i32, i32
  }
  func.func @transform_2(%arg0: i32) -> (i32, i32) {
    %c0_i32 = arith.constant 0 : i32
    %c0_i32_0 = arith.constant 0 : i32
    %c0_i32_1 = arith.constant 0 : i32
    return %c0_i32, %c0_i32_0 : i32, i32
  }
  func.func @transform_3(%arg0: i32) -> (i32, i32) {
    %c0_i32 = arith.constant 0 : i32
    %c0_i32_0 = arith.constant 0 : i32
    %c0_i32_1 = arith.constant 0 : i32
    return %c0_i32, %c0_i32_0 : i32, i32
  }
  func.func @transform_4(%arg0: i32) -> (i32, i32) {
    %c0_i32 = arith.constant 0 : i32
    %c0_i32_0 = arith.constant 0 : i32
    return %arg0, %c0_i32 : i32, i32
  }
}

</mosaic_0001>

<llo_original>
// kernel: _run_pallas.1
$region0: #{_run_pallas.1}
  #allocation0 [shape = 'u32[]', space=smem, size = 0x4, offset = 0x4, fixed_abs, tag = 'smem constant byte address 0x4 - core index']
  #allocation1 [shape = 'u32[144,128]{1,0:T(1,128)}', space=vmem, size = 0x12000, scoped, tag = 'internal scratch']
  %s0 = inlined_call_operand.hbm [shape: f32[8,17], index: 0, kind: input, shape index: {}]
  %s1 = inlined_call_operand.hbm [shape: f32[17,300], index: 1, kind: input, shape index: {}]
  %s2 = inlined_call_operand.vmem [shape: f32[1,300], index: 2, kind: input, shape index: {}]
  %s3 = inlined_call_operand.hbm [shape: f32[300,128], index: 3, kind: input, shape index: {}]
  %s4 = inlined_call_operand.hbm [shape: f32[8,128], index: 4, kind: output, shape index: {}]
  %s5 = sld [smem:[#allocation0]]
  $region38: #{_run_pallas.1} parent=0
    _
  %s7 = ssub.s32 1, %s5
  %s8 = scalar_select 0, %s7, %s5
  $region1: #{_run_pallas.1} parent=0
    #allocation2 [shape = 'u8[4096]{0}', space=vmem, size = 0x1000, scoped, tag = 'input window, operand 0, single buffered']
    #allocation3 [shape = 's32[1]{0}', space=sflag, size = 0x4, scoped, tag = 'scoped memory for _run_pallas.1']
    #allocation4 [shape = 's32[1]{0}', space=sflag, size = 0x4, scoped, tag = 'scoped memory for _run_pallas.1']
    #allocation5 [shape = 'u8[36864]{0}', space=vmem, size = 0x9000, scoped, tag = 'input window, operand 1, single buffered']
    #allocation6 [shape = 's32[1]{0}', space=sflag, size = 0x4, scoped, tag = 'scoped memory for _run_pallas.1']
    #allocation7 [shape = 'u8[155648]{0}', space=vmem, size = 0x26000, scoped, tag = 'input window, operand 3, single buffered']
    #allocation8 [shape = 'u8[4096]{0}', space=vmem, size = 0x1000, scoped, tag = 'output window, operand 0, single buffered']
    %9 = vsyncpa [#allocation3], 0
    %10 = vsyncpa [#allocation6], 0
    %11 = vsyncpa [#allocation4], 0
    // Predicated region
    $region2: #{_run_pallas.1} parent=1 // pred_check
      _
    $region3: #{_run_pallas.1} parent=1 // pred_check_branch
      %13 = sbr.rel (0) target = $region5
    $region4: #{_run_pallas.1} parent=1 // pred_region
      %s15 = ssub.s32 128, 128
      %16 = vsyncadd [#allocation3], %s15
      %s18 = sshll.u32 [#allocation2], 4
      %s19 = int_to_ptr.vmem [resolvable:$true] %s18
      %21 = dma.hbm_to_vmem [thread:$0]  %s0, 128, %s19, [#allocation3]
    $region5: #{_run_pallas.1} parent=1 // pred_fallthru
      _
    // Predicated region
    $region6: #{_run_pallas.1} parent=1 // pred_check
      _
    $region7: #{_run_pallas.1} parent=1 // pred_check_branch
      %23 = sbr.rel (0) target = $region9
    $region8: #{_run_pallas.1} parent=1 // pred_region
      %s25 = ssub.s32 1152, 1152
      %26 = vsyncadd [#allocation6], %s25
      %s27 = sshll.u32 [#allocation5], 4
      %s28 = int_to_ptr.vmem [resolvable:$true] %s27
      %33 = dma.hbm_to_vmem [thread:$0]  %s1, 1152, %s28, [#allocation6], 384, 384, 24
    $region9: #{_run_pallas.1} parent=1 // pred_fallthru
      _
    // Predicated region
    $region10: #{_run_pallas.1} parent=1 // pred_check
      _
    $region11: #{_run_pallas.1} parent=1 // pred_check_branch
      %35 = sbr.rel (0) target = $region13
    $region12: #{_run_pallas.1} parent=1 // pred_region
      _
    $region13: #{_run_pallas.1} parent=1 // pred_fallthru
      _
    // Predicated region
    $region14: #{_run_pallas.1} parent=1 // pred_check
      _
    $region15: #{_run_pallas.1} parent=1 // pred_check_branch
      %37 = sbr.rel (0) target = $region17
    $region16: #{_run_pallas.1} parent=1 // pred_region
      %s39 = ssub.s32 4864, 4864
      %40 = vsyncadd [#allocation6], %s39
      %s41 = sshll.u32 [#allocation7], 4
      %s42 = int_to_ptr.vmem [resolvable:$true] %s41
      %47 = dma.hbm_to_vmem [thread:$0]  %s3, 4864, %s42, [#allocation6], 128, 128, 8
    $region17: #{_run_pallas.1} parent=1 // pred_fallthru
      _
    // Predicated region
    $region18: #{_run_pallas.1} parent=1 // pred_check
      _
    $region19: #{_run_pallas.1} parent=1 // pred_check_branch
      %49 = sbr.rel (0) target = $region21
    $region20: #{_run_pallas.1} parent=1 // pred_region
      %50 = dma.done [#allocation3], 128
    $region21: #{_run_pallas.1} parent=1 // pred_fallthru
      _
    // Predicated region
    $region22: #{_run_pallas.1} parent=1 // pred_check
      _
    $region23: #{_run_pallas.1} parent=1 // pred_check_branch
      %52 = sbr.rel (0) target = $region25
    $region24: #{_run_pallas.1} parent=1 // pred_region
      %53 = dma.done [#allocation6], 1152
    $region25: #{_run_pallas.1} parent=1 // pred_fallthru
      _
    // Predicated region
    $region26: #{_run_pallas.1} parent=1 // pred_check
      _
    $region27: #{_run_pallas.1} parent=1 // pred_check_branch
      %55 = sbr.rel (0) target = $region29
    $region28: #{_run_pallas.1} parent=1 // pred_region
      %56 = dma.done [#allocation6], 4864
    $region29: #{_run_pallas.1} parent=1 // pred_fallthru
      _
    %v57 = vld [vmem:[#allocation2] sm:$0xff]
    %v58 = vld [vmem:[#allocation5] sm:$0xff]
    %v59 = vld [vmem:[#allocation5 + $0x8] sm:$0xff]
    %v60 = vld [vmem:[#allocation5 + $0x10] sm:$0xff]
    %v61 = vld [vmem:[#allocation5 + $0x18] sm:$0xff]
    %v62 = vld [vmem:[#allocation5 + $0x20] sm:$0xff]
    %v63 = vld [vmem:[#allocation5 + $0x28] sm:$0xff]
    %v64 = vld [vmem:[#allocation5 + $0x30] sm:$0x1]
    %v65 = vld [vmem:[#allocation5 + $0x38] sm:$0x1]
    %v66 = vld [vmem:[#allocation5 + $0x40] sm:$0x1]
    %v67 = vld [vmem:[%s2] sm:$0x7]
    %v69 = vlaneseq
    %v70 = vshrl.u32 %v69, 7
    %v71 = vsub.s32 0, %v70
    %v72 = vrot.slane %v67, %v71
    %v73 = vlaneseq
    %v74 = vshrl.u32 %v73, 7
    %v75 = vsub.s32 1, %v74
    %v76 = vrot.slane %v67, %v75
    %v77 = vlaneseq
    %v78 = vshrl.u32 %v77, 7
    %v79 = vsub.s32 2, %v78
    %v80 = vrot.slane %v67, %v79
    %vm84 = vcmask 138240
    %v86 = vsel %vm84, %v57, 0
    %vm88 = vcmask 1040384
    %v90 = vsel %vm88, %v64, 0
    %v93 = vsel %vm88, %v65, 0
    %v96 = vsel %vm88, %v66, 0
    %98 = vmatprep.subr.mxu0 0.0
    %99 = vmatpush1.msra.mxu0 0.0
    %100 = vmatprep.subr.mxu0 0.0
    %101 = vmatpush1.msra.mxu0 0.0
    %102 = vmatprep.subr.mxu0 0.0
    %103 = vmatpush1.msra.mxu0 0.0
    %104 = vmatprep.subr.mxu0 0.0
    %105 = vmatpush1.msra.mxu0 0.0
    %106 = vmatprep.subr.mxu0 0.0
    %107 = vmatpush1.msra.mxu0 0.0
    %108 = vmatprep.subr.mxu0 0.0
    %109 = vmatpush1.msra.mxu0 0.0
    %110 = vmatprep.subr.mxu0 0.0
    %111 = vmatpush1.msra.mxu0 0.0
    %112 = vmatprep.subr.mxu0 0.0
    %113 = vmatpush1.msra.mxu0 0.0
    %114 = vmatprep.subr.mxu0 0.0
    %115 = vmatpush1.msra.mxu0 0.0
    %116 = vmatprep.subr.mxu0 0.0
    %117 = vmatpush1.msra.mxu0 0.0
    %118 = vmatprep.subr.mxu0 0.0
    %119 = vmatpush1.msra.mxu0 0.0
    %120 = vmatprep.subr.mxu0 0.0
    %121 = vmatpush1.msra.mxu0 0.0
    %122 = vmatprep.subr.mxu0 0.0
    %123 = vmatpush1.msra.mxu0 0.0
    %124 = vmatprep.subr.mxu0 %v93
    %125 = vmatpush1.msra.mxu0 %v90
    %126 = vmatprep.subr.mxu0 %v62
    %127 = vmatpush1.msra.mxu0 %v61
    %128 = vmatprep.subr.mxu0 %v59
    %129 = vmatpush1.msra.mxu0 %v58
    %130 = vmatprep.subr.mxu0 0.0
    %131 = vmatpush2.msra.mxu0 0.0
    %132 = vmatprep.subr.mxu0 0.0
    %133 = vmatpush2.msra.mxu0 0.0
    %134 = vmatprep.subr.mxu0 0.0
    %135 = vmatpush2.msra.mxu0 0.0
    %136 = vmatprep.subr.mxu0 0.0
    %137 = vmatpush2.msra.mxu0 0.0
    %138 = vmatprep.subr.mxu0 0.0
    %139 = vmatpush2.msra.mxu0 0.0
    %140 = vmatprep.subr.mxu0 0.0
    %141 = vmatpush2.msra.mxu0 0.0
    %142 = vmatprep.subr.mxu0 0.0
    %143 = vmatpush2.msra.mxu0 0.0
    %144 = vmatprep.subr.mxu0 0.0
    %145 = vmatpush2.msra.mxu0 0.0
    %146 = vmatprep.subr.mxu0 0.0
    %147 = vmatpush2.msra.mxu0 0.0
    %148 = vmatprep.subr.mxu0 0.0
    %149 = vmatpush2.msra.mxu0 0.0
    %150 = vmatprep.subr.mxu0 0.0
    %151 = vmatpush2.msra.mxu0 0.0
    %152 = vmatprep.subr.mxu0 0.0
    %153 = vmatpush2.msra.mxu0 0.0
    %154 = vmatprep.subr.mxu0 0.0
    %155 = vmatpush2.msra.mxu0 0.0
    %156 = vmatprep.subr.mxu0 0.0
    %157 = vmatpush2.msra.mxu0 0.0
    %158 = vmatprep.subr.mxu0 0.0
    %159 = vmatpush2.msra.mxu0 0.0
    %160 = vmatprep.subr.mxu0 0.0
    %161 = vmatpush2.msra.mxu0 0.0
    %162 = vmatprep.mubr.f32.mxu0 0.0
    %163 = vmatmul.mubr.f32.gmra.mxu0 %v86
    %v164 = vpop.f32.mrf.mxu0
    %v165 = vadd.f32 %v72, %v164
    %v166 = vpop.f32.mrf.mxu0
    %v167 = vadd.f32 %v76, %v166
    %168 = vdwg.mxu0
    %169 = vmatprep.subr.mxu0 0.0
    %170 = vmatpush1.msra.mxu0 0.0
    %171 = vmatprep.subr.mxu0 0.0
    %172 = vmatpush1.msra.mxu0 0.0
    %173 = vmatprep.subr.mxu0 0.0
    %174 = vmatpush1.msra.mxu0 0.0
    %175 = vmatprep.subr.mxu0 0.0
    %176 = vmatpush1.msra.mxu0 0.0
    %177 = vmatprep.subr.mxu0 0.0
    %178 = vmatpush1.msra.mxu0 0.0
    %179 = vmatprep.subr.mxu0 0.0
    %180 = vmatpush1.msra.mxu0 0.0
    %181 = vmatprep.subr.mxu0 0.0
    %182 = vmatpush1.msra.mxu0 0.0
    %183 = vmatprep.subr.mxu0 0.0
    %184 = vmatpush1.msra.mxu0 0.0
    %185 = vmatprep.subr.mxu0 0.0
    %186 = vmatpush1.msra.mxu0 0.0
    %187 = vmatprep.subr.mxu0 0.0
    %188 = vmatpush1.msra.mxu0 0.0
    %189 = vmatprep.subr.mxu0 0.0
    %190 = vmatpush1.msra.mxu0 0.0
    %191 = vmatprep.subr.mxu0 0.0
    %192 = vmatpush1.msra.mxu0 0.0
    %193 = vmatprep.subr.mxu0 0.0
    %194 = vmatpush1.msra.mxu0 0.0
    %195 = vmatprep.subr.mxu0 0.0
    %196 = vmatpush1.msra.mxu0 %v96
    %197 = vmatprep.subr.mxu0 0.0
    %198 = vmatpush1.msra.mxu0 %v63
    %199 = vmatprep.subr.mxu0 0.0
    %200 = vmatpush1.msra.mxu0 %v60
    %201 = vmatprep.subr.mxu0 0.0
    %202 = vmatpush2.msra.mxu0 0.0
    %203 = vmatprep.subr.mxu0 0.0
    %204 = vmatpush2.msra.mxu0 0.0
    %205 = vmatprep.subr.mxu0 0.0
    %206 = vmatpush2.msra.mxu0 0.0
    %207 = vmatprep.subr.mxu0 0.0
    %208 = vmatpush2.msra.mxu0 0.0
    %209 = vmatprep.subr.mxu0 0.0
    %210 = vmatpush2.msra.mxu0 0.0
    %211 = vmatprep.subr.mxu0 0.0
    %212 = vmatpush2.msra.mxu0 0.0
    %213 = vmatprep.subr.mxu0 0.0
    %214 = vmatpush2.msra.mxu0 0.0
    %215 = vmatprep.subr.mxu0 0.0
    %216 = vmatpush2.msra.mxu0 0.0
    %217 = vmatprep.subr.mxu0 0.0
    %218 = vmatpush2.msra.mxu0 0.0
    %219 = vmatprep.subr.mxu0 0.0
    %220 = vmatpush2.msra.mxu0 0.0
    %221 = vmatprep.subr.mxu0 0.0
    %222 = vmatpush2.msra.mxu0 0.0
    %223 = vmatprep.subr.mxu0 0.0
    %224 = vmatpush2.msra.mxu0 0.0
    %225 = vmatprep.subr.mxu0 0.0
    %226 = vmatpush2.msra.mxu0 0.0
    %227 = vmatprep.subr.mxu0 0.0
    %228 = vmatpush2.msra.mxu0 0.0
    %229 = vmatprep.subr.mxu0 0.0
    %230 = vmatpush2.msra.mxu0 0.0
    %231 = vmatprep.subr.mxu0 0.0
    %232 = vmatpush2.msra.mxu0 0.0
    %233 = vmatprep.mubr.f32.mxu0 0.0
    %234 = vmatmul.mubr.f32.gmra.mxu0 %v86
    %v235 = vpop.f32.mrf.mxu0
    %v236 = vadd.f32 %v80, %v235
    %v237 = vpop.f32.mrf.mxu0
    %238 = vdwg.mxu0
    %v239 = vmax.f32 %v165, 0.0
    %v240 = vmax.f32 %v167, 0.0
    %v241 = vmax.f32 %v236, 0.0
    %v242 = vld [vmem:[#allocation7] sm:$0xff]
    %v243 = vld [vmem:[#allocation7 + $0x8] sm:$0xff]
    %v244 = vld [vmem:[#allocation7 + $0x10] sm:$0xff]
    %v245 = vld [vmem:[#allocation7 + $0x18] sm:$0xff]
    %v246 = vld [vmem:[#allocation7 + $0x20] sm:$0xff]
    %v247 = vld [vmem:[#allocation7 + $0x28] sm:$0xff]
    %v248 = vld [vmem:[#allocation7 + $0x30] sm:$0xff]
    %v249 = vld [vmem:[#allocation7 + $0x38] sm:$0xff]
    %v250 = vld [vmem:[#allocation7 + $0x40] sm:$0xff]
    %v251 = vld [vmem:[#allocation7 + $0x48] sm:$0xff]
    %v252 = vld [vmem:[#allocation7 + $0x50] sm:$0xff]
    %v253 = vld [vmem:[#allocation7 + $0x58] sm:$0xff]
    %v254 = vld [vmem:[#allocation7 + $0x60] sm:$0xff]
    %v255 = vld [vmem:[#allocation7 + $0x68] sm:$0xff]
    %v256 = vld [vmem:[#allocation7 + $0x70] sm:$0xff]
    %v257 = vld [vmem:[#allocation7 + $0x78] sm:$0xff]
    %v258 = vld [vmem:[#allocation7 + $0x80] sm:$0xff]
    %v259 = vld [vmem:[#allocation7 + $0x88] sm:$0xff]
    %v260 = vld [vmem:[#allocation7 + $0x90] sm:$0xff]
    %v261 = vld [vmem:[#allocation7 + $0x98] sm:$0xff]
    %v262 = vld [vmem:[#allocation7 + $0xa0] sm:$0xff]
    %v263 = vld [vmem:[#allocation7 + $0xa8] sm:$0xff]
    %v264 = vld [vmem:[#allocation7 + $0xb0] sm:$0xff]
    %v265 = vld [vmem:[#allocation7 + $0xb8] sm:$0xff]
    %v266 = vld [vmem:[#allocation7 + $0xc0] sm:$0xff]
    %v267 = vld [vmem:[#allocation7 + $0xc8] sm:$0xff]
    %v268 = vld [vmem:[#allocation7 + $0xd0] sm:$0xff]
    %v269 = vld [vmem:[#allocation7 + $0xd8] sm:$0xff]
    %v270 = vld [vmem:[#allocation7 + $0xe0] sm:$0xff]
    %v271 = vld [vmem:[#allocation7 + $0xe8] sm:$0xff]
    %v272 = vld [vmem:[#allocation7 + $0xf0] sm:$0xff]
    %v273 = vld [vmem:[#allocation7 + $0xf8] sm:$0xff]
    %v274 = vld [vmem:[#allocation7 + $0x100] sm:$0xff]
    %v275 = vld [vmem:[#allocation7 + $0x108] sm:$0xff]
    %v276 = vld [vmem:[#allocation7 + $0x110] sm:$0xff]
    %v277 = vld [vmem:[#allocation7 + $0x118] sm:$0xff]
    %v278 = vld [vmem:[#allocation7 + $0x120] sm:$0xff]
    %v279 = vld [vmem:[#allocation7 + $0x128] sm:$0xf]
    %vm280 = vcmask 359424
    %v282 = vsel %vm280, %v241, 0
    %vm284 = vcmask 1043456
    %v286 = vsel %vm284, %v279, 0
    %288 = vmatprep.subr.mxu0 0.0
    %289 = vmatpush1.msra.mxu0 %v257
    %290 = vmatprep.subr.mxu0 0.0
    %291 = vmatpush1.msra.mxu0 %v256
    %292 = vmatprep.subr.mxu0 0.0
    %293 = vmatpush1.msra.mxu0 %v255
    %294 = vmatprep.subr.mxu0 0.0
    %295 = vmatpush1.msra.mxu0 %v254
    %296 = vmatprep.subr.mxu0 0.0
    %297 = vmatpush1.msra.mxu0 %v253
    %298 = vmatprep.subr.mxu0 0.0
    %299 = vmatpush1.msra.mxu0 %v252
    %300 = vmatprep.subr.mxu0 0.0
    %301 = vmatpush1.msra.mxu0 %v251
    %302 = vmatprep.subr.mxu0 0.0
    %303 = vmatpush1.msra.mxu0 %v250
    %304 = vmatprep.subr.mxu0 0.0
    %305 = vmatpush1.msra.mxu0 %v249
    %306 = vmatprep.subr.mxu0 0.0
    %307 = vmatpush1.msra.mxu0 %v248
    %308 = vmatprep.subr.mxu0 0.0
    %309 = vmatpush1.msra.mxu0 %v247
    %310 = vmatprep.subr.mxu0 0.0
    %311 = vmatpush1.msra.mxu0 %v246
    %312 = vmatprep.subr.mxu0 0.0
    %313 = vmatpush1.msra.mxu0 %v245
    %314 = vmatprep.subr.mxu0 0.0
    %315 = vmatpush1.msra.mxu0 %v244
    %316 = vmatprep.subr.mxu0 0.0
    %317 = vmatpush1.msra.mxu0 %v243
    %318 = vmatprep.subr.mxu0 0.0
    %319 = vmatpush1.msra.mxu0 %v242
    %320 = vmatprep.subr.mxu0 0.0
    %321 = vmatpush2.msra.mxu0 %v273
    %322 = vmatprep.subr.mxu0 0.0
    %323 = vmatpush2.msra.mxu0 %v272
    %324 = vmatprep.subr.mxu0 0.0
    %325 = vmatpush2.msra.mxu0 %v271
    %326 = vmatprep.subr.mxu0 0.0
    %327 = vmatpush2.msra.mxu0 %v270
    %328 = vmatprep.subr.mxu0 0.0
    %329 = vmatpush2.msra.mxu0 %v269
    %330 = vmatprep.subr.mxu0 0.0
    %331 = vmatpush2.msra.mxu0 %v268
    %332 = vmatprep.subr.mxu0 0.0
    %333 = vmatpush2.msra.mxu0 %v267
    %334 = vmatprep.subr.mxu0 0.0
    %335 = vmatpush2.msra.mxu0 %v266
    %336 = vmatprep.subr.mxu0 0.0
    %337 = vmatpush2.msra.mxu0 %v265
    %338 = vmatprep.subr.mxu0 0.0
    %339 = vmatpush2.msra.mxu0 %v264
    %340 = vmatprep.subr.mxu0 0.0
    %341 = vmatpush2.msra.mxu0 %v263
    %342 = vmatprep.subr.mxu0 0.0
    %343 = vmatpush2.msra.mxu0 %v262
    %344 = vmatprep.subr.mxu0 0.0
    %345 = vmatpush2.msra.mxu0 %v261
    %346 = vmatprep.subr.mxu0 0.0
    %347 = vmatpush2.msra.mxu0 %v260
    %348 = vmatprep.subr.mxu0 0.0
    %349 = vmatpush2.msra.mxu0 %v259
    %350 = vmatprep.subr.mxu0 0.0
    %351 = vmatpush2.msra.mxu0 %v258
    %352 = vmatprep.mubr.f32.mxu0 %v240
    %353 = vmatmul.mubr.f32.gmra.mxu0 %v239
    %v354 = vpop.f32.mrf.mxu0
    %v355 = vadd.f32 0.0, %v354
    %v356 = vpop.f32.mrf.mxu0
    %357 = vdwg.mxu0
    %358 = vmatprep.subr.mxu0 0.0
    %359 = vmatpush1.msra.mxu0 0.0
    %360 = vmatprep.subr.mxu0 0.0
    %361 = vmatpush1.msra.mxu0 0.0
    %362 = vmatprep.subr.mxu0 0.0
    %363 = vmatpush1.msra.mxu0 0.0
    %364 = vmatprep.subr.mxu0 0.0
    %365 = vmatpush1.msra.mxu0 0.0
    %366 = vmatprep.subr.mxu0 0.0
    %367 = vmatpush1.msra.mxu0 0.0
    %368 = vmatprep.subr.mxu0 0.0
    %369 = vmatpush1.msra.mxu0 0.0
    %370 = vmatprep.subr.mxu0 0.0
    %371 = vmatpush1.msra.mxu0 0.0
    %372 = vmatprep.subr.mxu0 0.0
    %373 = vmatpush1.msra.mxu0 0.0
    %374 = vmatprep.subr.mxu0 0.0
    %375 = vmatpush1.msra.mxu0 0.0
    %376 = vmatprep.subr.mxu0 0.0
    %377 = vmatpush1.msra.mxu0 0.0
    %378 = vmatprep.subr.mxu0 0.0
    %379 = vmatpush1.msra.mxu0 %v286
    %380 = vmatprep.subr.mxu0 0.0
    %381 = vmatpush1.msra.mxu0 %v278
    %382 = vmatprep.subr.mxu0 0.0
    %383 = vmatpush1.msra.mxu0 %v277
    %384 = vmatprep.subr.mxu0 0.0
    %385 = vmatpush1.msra.mxu0 %v276
    %386 = vmatprep.subr.mxu0 0.0
    %387 = vmatpush1.msra.mxu0 %v275
    %388 = vmatprep.subr.mxu0 0.0
    %389 = vmatpush1.msra.mxu0 %v274
    %390 = vmatprep.subr.mxu0 0.0
    %391 = vmatpush2.msra.mxu0 0.0
    %392 = vmatprep.subr.mxu0 0.0
    %393 = vmatpush2.msra.mxu0 0.0
    %394 = vmatprep.subr.mxu0 0.0
    %395 = vmatpush2.msra.mxu0 0.0
    %396 = vmatprep.subr.mxu0 0.0
    %397 = vmatpush2.msra.mxu0 0.0
    %398 = vmatprep.subr.mxu0 0.0
    %399 = vmatpush2.msra.mxu0 0.0
    %400 = vmatprep.subr.mxu0 0.0
    %401 = vmatpush2.msra.mxu0 0.0
    %402 = vmatprep.subr.mxu0 0.0
    %403 = vmatpush2.msra.mxu0 0.0
    %404 = vmatprep.subr.mxu0 0.0
    %405 = vmatpush2.msra.mxu0 0.0
    %406 = vmatprep.subr.mxu0 0.0
    %407 = vmatpush2.msra.mxu0 0.0
    %408 = vmatprep.subr.mxu0 0.0
    %409 = vmatpush2.msra.mxu0 0.0
    %410 = vmatprep.subr.mxu0 0.0
    %411 = vmatpush2.msra.mxu0 0.0
    %412 = vmatprep.subr.mxu0 0.0
    %413 = vmatpush2.msra.mxu0 0.0
    %414 = vmatprep.subr.mxu0 0.0
    %415 = vmatpush2.msra.mxu0 0.0
    %416 = vmatprep.subr.mxu0 0.0
    %417 = vmatpush2.msra.mxu0 0.0
    %418 = vmatprep.subr.mxu0 0.0
    %419 = vmatpush2.msra.mxu0 0.0
    %420 = vmatprep.subr.mxu0 0.0
    %421 = vmatpush2.msra.mxu0 0.0
    %422 = vmatprep.mubr.f32.mxu0 0.0
    %423 = vmatmul.mubr.f32.gmra.mxu0 %v282
    %v424 = vpop.f32.mrf.mxu0
    %v425 = vadd.f32 %v355, %v424
    %v426 = vpop.f32.mrf.mxu0
    %427 = vdwg.mxu0
    %428 = vst [vmem:[#allocation8] sm:$0xff] %v425
    // Predicated region
    $region30: #{_run_pallas.1} parent=1 // pred_check
      _
    $region31: #{_run_pallas.1} parent=1 // pred_check_branch
      %430 = sbr.rel (0) target = $region33
    $region32: #{_run_pallas.1} parent=1 // pred_region
      %s432 = ssub.s32 128, 128
      %433 = vsyncadd [#allocation4], %s432
      %s435 = sshll.u32 [#allocation8], 4
      %s436 = int_to_ptr.vmem [resolvable:$true] %s435
      %438 = dma.vmem_to_hbm [thread:$0]  %s436, 128, %s4, [#allocation4]
    $region33: #{_run_pallas.1} parent=1 // pred_fallthru
      _
    // Predicated region
    $region34: #{_run_pallas.1} parent=1 // pred_check
      _
    $region35: #{_run_pallas.1} parent=1 // pred_check_branch
      %440 = sbr.rel (0) target = $region37
    $region36: #{_run_pallas.1} parent=1 // pred_region
      %441 = dma.done [#allocation4], 128
    $region37: #{_run_pallas.1} parent=1 // pred_fallthru
      _
    %442 = vsyncpa [#allocation3], 1
    %443 = vsyncpa [#allocation6], 1
    %444 = vsyncpa [#allocation4], 1

</llo_original>
